<compile_context>
chip_gen: v5e
topology: v5e:2x2
jax: 0.10.0
libtpu: 0.0.40
codegen_flags: <defaults>
</compile_context>

<pallas_src>
import functools

import numpy as np
import jax
import jax.numpy as jnp
from jax.experimental import pallas as pl
from jax.experimental.pallas import tpu as pltpu

WIN_LEN = 16          # win_len
WIN_INC = 8           # win_inc (== stride)
FFT_LEN = 16          # fft_len
STRIDE = WIN_INC
FREQ = FFT_LEN + 2    # input channels: real+imag stacked = N + 2
assert WIN_LEN == 2 * STRIDE, "kernel assumes 50% overlap (win_inc == win_len // 2)"


def _init_kernels(win_len, fft_len, win_type="hamming"):
    """Deterministic re-implementation of init_kernels(..., invers=True)."""
    if win_type is None or win_type == "None":
        window = np.ones(win_len)
    else:
        # scipy.signal.get_window('hamming', win_len, fftbins=True) ** 0.5
        n = np.arange(win_len)
        window = (0.54 - 0.46 * np.cos(2.0 * np.pi * n / win_len)) ** 0.5
    N = fft_len
    fourier_basis = np.fft.rfft(np.eye(N))[:win_len]           # [win_len, N//2+1]
    real_kernel = np.real(fourier_basis)
    imag_kernel = np.imag(fourier_basis)
    kernel = np.concatenate([real_kernel, imag_kernel], 1).T   # [N+2, win_len]
    kernel = np.linalg.pinv(kernel).T                          # invers=True
    kernel = kernel * window                                   # [N+2, win_len]
    return kernel.astype(np.float32), window.astype(np.float32)


_W_NP, _WINDOW_NP = _init_kernels(WIN_LEN, FFT_LEN, "hamming")

# ---- fold the interior 1/(coff + 1e-8) into the synthesis weights ----------
# For 50% overlap, output column j (a block of STRIDE samples, position k):
#   coff[j, k] = win2[k]               (j == 0)
#              = win2[k] + win2[k+8]   (1 <= j <= T-1)   <- column-constant
#              = win2[k + 8]           (j == T)
_WIN2 = _WINDOW_NP.astype(np.float64) ** 2
_COFF_INT = _WIN2[:STRIDE] + _WIN2[STRIDE:] + 1e-8            # [STRIDE], interior denom
_S_INT = 1.0 / _COFF_INT
# Transposed, interior-scaled basis: wt[w, f] = W[f, w] / coff_interior[w % STRIDE].
_WT_FOLDED_NP = np.ascontiguousarray(
    (_W_NP.T * np.concatenate([_S_INT, _S_INT])[:, None]).astype(np.float32))  # [WIN, F]
# Edge corrections (applied in-kernel to output columns 0 and T only).
_CORR_NP = np.stack(
    [_COFF_INT / (_WIN2[:STRIDE] + 1e-8),      # column 0
     _COFF_INT / (_WIN2[STRIDE:] + 1e-8)],     # column T
    axis=1).astype(np.float32)                 # [STRIDE, 2]


def _istft_kernel(x_ref, wt_ref, corr_ref, out_ref, *, block_b, t):
    # x_ref:   (block_b, F, T)        batch block, freq-major (module's layout)
    # wt_ref:  (WIN_LEN, F)           transposed basis, interior 1/coff folded in
    # corr_ref:(STRIDE, 2)            edge corrections for output columns 0 and T
    # out_ref: (block_b, STRIDE, T+1) out[b, k, j] == output sample j*STRIDE + k
    wt = wt_ref[...]
    corr0 = corr_ref[:, 0:1]        # [STRIDE, 1]
    corr_t = corr_ref[:, 1:2]       # [STRIDE, 1]
    for bi in range(block_b):       # static unroll; block_b is a compile-time int
        # frames[w, j] = sum_f wt[w, f] * x[f, j]; long T axis stays on lanes.
        frames = jnp.dot(wt, x_ref[bi], preferred_element_type=jnp.float32)  # [WIN, T]
        a = frames[:STRIDE, :]      # first half of frame j  -> output column j
        b = frames[STRIDE:, :]      # second half of frame j -> output column j+1
        # 50%-overlap add with folded interior normalization: three direct
        # stores, no [STRIDE, T+1] temporaries, no full-width divide/multiply.
        out_ref[bi, :, 0:1] = a[:, 0:1] * corr0
        if t > 1:
            out_ref[bi, :, 1:t] = a[:, 1:] + b[:, : t - 1]
        out_ref[bi, :, t:t + 1] = b[:, t - 1:] * corr_t


def _choose_block_b(B, T, F, x_itemsize):
    """Batch elements per grid step."""
    per_b_vmem = 2 * F * T * x_itemsize + 2 * STRIDE * (T + 1) * 4   # double-buffered
    per_b_hbm = F * T * x_itemsize + STRIDE * (T + 1) * 4
    budget = 24 << 20          # headroom under v7x's 32 MiB default scoped VMEM
    bb = max(1, min(B, budget // max(per_b_vmem, 1)))
    bb = min(bb, 64)           # bound the static unroll length
    # Split into >= 2 "parallel" steps (v7x has 2 TensorCores) only when each
    # step still moves enough bytes to amortize the ~0.35 us per-step overhead.
    if B >= 2 and (B // 2) * per_b_hbm >= (256 << 10):
        bb = min(bb, B // 2)
    while B % bb:              # keep BlockSpecs simple: bb must divide B
        bb -= 1
    return bb


def conv_istft_blocks(inputs, phase=None, use_bf16_inputs=False):
    """Runs the kernel and returns its native lane-dense layout [B, STRIDE, T+1],
    where out[b, k, j] == output sample j*STRIDE + k.  A fused consumer can use
    this directly and skip the transpose back to [B, 1, L]."""
    if phase is not None:
        # Elementwise cos/sin glue (outside the hot path), as in the module.
        real = inputs * jnp.cos(phase)
        imag = inputs * jnp.sin(phase)
        inputs = jnp.concatenate([real, imag], axis=1)

    in_dtype = jnp.bfloat16 if use_bf16_inputs else jnp.float32
    x = inputs.astype(in_dtype)                        # [B, F, T] -- no wrapper transpose
    B, F_, T = x.shape

    wt = jnp.asarray(_WT_FOLDED_NP).astype(in_dtype)   # [WIN, F]
    corr = jnp.asarray(_CORR_NP)                       # [STRIDE, 2]

    bb = _choose_block_b(B, T, F_, 2 if use_bf16_inputs else 4)
    kernel = functools.partial(_istft_kernel, block_b=bb, t=T)

    return pl.pallas_call(
        kernel,
        out_shape=jax.ShapeDtypeStruct((B, STRIDE, T + 1), jnp.float32),
        grid=(B // bb,),
        in_specs=[
            pl.BlockSpec((bb, F_, T), lambda i: (i, 0, 0)),
            pl.BlockSpec((WIN_LEN, F_), lambda i: (0, 0)),
            pl.BlockSpec((STRIDE, 2), lambda i: (0, 0)),
        ],
        out_specs=pl.BlockSpec((bb, STRIDE, T + 1), lambda i: (i, 0, 0)),
        compiler_params=pltpu.CompilerParams(dimension_semantics=("parallel",)),
    )(x, wt, corr)


@functools.partial(jax.jit, static_argnames=("use_bf16_inputs",))
def conv_istft(inputs, phase=None, *, use_bf16_inputs=False):
    """Matches ConviSTFT.forward: inputs [B, N+2, T] (or mags + phase) -> [B, 1, L]."""
    out2 = conv_istft_blocks(inputs, phase, use_bf16_inputs)
    B, _, Tp1 = out2.shape
    L = Tp1 * STRIDE                               # == (T-1)*STRIDE + WIN_LEN
    # Layout plumbing back to the module's [B, 1, L]; kept under jit so it can
    # fuse with callers (or call conv_istft_blocks directly and skip it).
    return jnp.transpose(out2, (0, 2, 1)).reshape(B, 1, L)


def _reference(inputs):
    """Plain-JAX reference of the PyTorch forward (phase=None path)."""
    x = jnp.transpose(inputs, (0, 2, 1)).astype(jnp.float32)        # [B, T, F]
    frames = jnp.einsum("btf,fw->btw", x, jnp.asarray(_W_NP))       # [B, T, WIN]
    B, T, _ = frames.shape
    L = (T - 1) * STRIDE + WIN_LEN
    out = jnp.zeros((B, 1, L), jnp.float32)
    coff = jnp.zeros((L,), jnp.float32)
    win2 = jnp.asarray(_WINDOW_NP) ** 2
    for t in range(T):
        sl = slice(t * STRIDE, t * STRIDE + WIN_LEN)
        out = out.at[:, 0, sl].add(frames[:, t])
        coff = coff.at[sl].add(win2)
    return out / (coff + 1e-8)


if __name__ == "__main__":
    key = jax.random.PRNGKey(0)
    B, T = 2, 8
    inputs = jax.random.normal(key, (B, FREQ, T), dtype=jnp.float32)  # [B, N+2, T]

    out = jax.block_until_ready(conv_istft(inputs))   # [2, 1, (T-1)*stride + win_len] = [2, 1, 72]
    ref = jax.block_until_ready(_reference(inputs))

    assert out.shape == (B, 1, (T - 1) * STRIDE + WIN_LEN)
    assert jnp.allclose(out, ref, atol=1e-4, rtol=1e-4), "Pallas output mismatch"

    print("KERNEL_OK")
</pallas_src>

<mosaic_0001>
module attributes {stable_mosaic.version = 11 : i64} {
  func.func @_istft_kernel(%arg0: i32, %arg1: memref<2x18x8xf32, #tpu.memory_space<vmem>>, %arg2: memref<16x18xf32, #tpu.memory_space<vmem>>, %arg3: memref<8x2xf32, #tpu.memory_space<vmem>>, %arg4: memref<2x8x9xf32, #tpu.memory_space<vmem>>) attributes {dimension_semantics = [#tpu.dimension_semantics<parallel>], iteration_bounds = array<i64: 1>, scalar_prefetch = 0 : i64, scratch_operands = 0 : i64, tpu.core_type = #tpu.core_type<tc>, window_params = [{transform_indices = @transform_0, window_bounds = array<i64: 2, 18, 8>}, {pipeline_mode = #tpu.pipeline_mode<synchronous>, transform_indices = @transform_1, window_bounds = array<i64: 16, 18>}, {pipeline_mode = #tpu.pipeline_mode<synchronous>, transform_indices = @transform_2, window_bounds = array<i64: 8, 2>}, {transform_indices = @transform_3, window_bounds = array<i64: 2, 8, 9>}]} {
    %c0 = arith.constant 0 : index
    %c0_0 = arith.constant 0 : index
    %0 = vector.load %arg2[%c0, %c0_0] : memref<16x18xf32, #tpu.memory_space<vmem>>, vector<16x18xf32>
    %c0_1 = arith.constant 0 : index
    %c0_2 = arith.constant 0 : index
    %1 = vector.load %arg3[%c0_1, %c0_2] : memref<8x2xf32, #tpu.memory_space<vmem>>, vector<8x1xf32>
    %c0_3 = arith.constant 0 : index
    %c1 = arith.constant 1 : index
    %2 = vector.load %arg3[%c0_3, %c1] : memref<8x2xf32, #tpu.memory_space<vmem>>, vector<8x1xf32>
    %c0_4 = arith.constant 0 : index
    %c0_5 = arith.constant 0 : index
    %c0_6 = arith.constant 0 : index
    %3 = vector.load %arg1[%c0_4, %c0_5, %c0_6] : memref<2x18x8xf32, #tpu.memory_space<vmem>>, vector<1x18x8xf32>
    %4 = vector.shape_cast %3 : vector<1x18x8xf32> to vector<18x8xf32>
    %cst = arith.constant dense<0.000000e+00> : vector<16x8xf32>
    %5 = tpu.matmul %0, %4, %cst {dimension_numbers = #tpu.dot_dimension_numbers<[1], [0], [0], [1], [0, 0, 1, 1], [], []>} : vector<16x18xf32>, vector<18x8xf32>, vector<16x8xf32> -> vector<16x8xf32>
    %6 = vector.extract_strided_slice %5 {offsets = [0, 0], sizes = [8, 8], strides = [1, 1]} : vector<16x8xf32> to vector<8x8xf32>
    %7 = vector.extract_strided_slice %5 {offsets = [8, 0], sizes = [8, 8], strides = [1, 1]} : vector<16x8xf32> to vector<8x8xf32>
    %8 = vector.extract_strided_slice %6 {offsets = [0, 0], sizes = [8, 1], strides = [1, 1]} : vector<8x8xf32> to vector<8x1xf32>
    %9 = arith.mulf %8, %1 : vector<8x1xf32>
    %c0_7 = arith.constant 0 : index
    %c0_8 = arith.constant 0 : index
    %c0_9 = arith.constant 0 : index
    %10 = vector.load %arg4[%c0_7, %c0_8, %c0_9] : memref<2x8x9xf32, #tpu.memory_space<vmem>>, vector<1x8x1xf32>
    %11 = vector.shape_cast %10 : vector<1x8x1xf32> to vector<8x1xf32>
    %12 = vector.shape_cast %9 : vector<8x1xf32> to vector<1x8x1xf32>
    tpu.vector_store %arg4[%c0_7, %c0_8, %c0_9], %12 {strides = array<i32>} : memref<2x8x9xf32, #tpu.memory_space<vmem>>, vector<1x8x1xf32>,
    %13 = vector.extract_strided_slice %6 {offsets = [0, 1], sizes = [8, 7], strides = [1, 1]} : vector<8x8xf32> to vector<8x7xf32>
    %14 = vector.extract_strided_slice %7 {offsets = [0, 0], sizes = [8, 7], strides = [1, 1]} : vector<8x8xf32> to vector<8x7xf32>
    %15 = arith.addf %13, %14 : vector<8x7xf32>
    %c0_10 = arith.constant 0 : index
    %c0_11 = arith.constant 0 : index
    %c1_12 = arith.constant 1 : index
    %16 = vector.load %arg4[%c0_10, %c0_11, %c1_12] : memref<2x8x9xf32, #tpu.memory_space<vmem>>, vector<1x8x7xf32>
    %17 = vector.shape_cast %16 : vector<1x8x7xf32> to vector<8x7xf32>
    %18 = vector.shape_cast %15 : vector<8x7xf32> to vector<1x8x7xf32>
    tpu.vector_store %arg4[%c0_10, %c0_11, %c1_12], %18 {strides = array<i32>} : memref<2x8x9xf32, #tpu.memory_space<vmem>>, vector<1x8x7xf32>,
    %19 = vector.extract_strided_slice %7 {offsets = [0, 7], sizes = [8, 1], strides = [1, 1]} : vector<8x8xf32> to vector<8x1xf32>
    %20 = arith.mulf %19, %2 : vector<8x1xf32>
    %c0_13 = arith.constant 0 : index
    %c0_14 = arith.constant 0 : index
    %c8 = arith.constant 8 : index
    %21 = vector.load %arg4[%c0_13, %c0_14, %c8] : memref<2x8x9xf32, #tpu.memory_space<vmem>>, vector<1x8x1xf32>
    %22 = vector.shape_cast %21 : vector<1x8x1xf32> to vector<8x1xf32>
    %23 = vector.shape_cast %20 : vector<8x1xf32> to vector<1x8x1xf32>
    tpu.vector_store %arg4[%c0_13, %c0_14, %c8], %23 {strides = array<i32>} : memref<2x8x9xf32, #tpu.memory_space<vmem>>, vector<1x8x1xf32>,
    %c1_15 = arith.constant 1 : index
    %c0_16 = arith.constant 0 : index
    %c0_17 = arith.constant 0 : index
    %24 = vector.load %arg1[%c1_15, %c0_16, %c0_17] : memref<2x18x8xf32, #tpu.memory_space<vmem>>, vector<1x18x8xf32>
    %25 = vector.shape_cast %24 : vector<1x18x8xf32> to vector<18x8xf32>
    %cst_18 = arith.constant dense<0.000000e+00> : vector<16x8xf32>
    %26 = tpu.matmul %0, %25, %cst_18 {dimension_numbers = #tpu.dot_dimension_numbers<[1], [0], [0], [1], [0, 0, 1, 1], [], []>} : vector<16x18xf32>, vector<18x8xf32>, vector<16x8xf32> -> vector<16x8xf32>
    %27 = vector.extract_strided_slice %26 {offsets = [0, 0], sizes = [8, 8], strides = [1, 1]} : vector<16x8xf32> to vector<8x8xf32>
    %28 = vector.extract_strided_slice %26 {offsets = [8, 0], sizes = [8, 8], strides = [1, 1]} : vector<16x8xf32> to vector<8x8xf32>
    %29 = vector.extract_strided_slice %27 {offsets = [0, 0], sizes = [8, 1], strides = [1, 1]} : vector<8x8xf32> to vector<8x1xf32>
    %30 = arith.mulf %29, %1 : vector<8x1xf32>
    %c1_19 = arith.constant 1 : index
    %c0_20 = arith.constant 0 : index
    %c0_21 = arith.constant 0 : index
    %31 = vector.load %arg4[%c1_19, %c0_20, %c0_21] : memref<2x8x9xf32, #tpu.memory_space<vmem>>, vector<1x8x1xf32>
    %32 = vector.shape_cast %31 : vector<1x8x1xf32> to vector<8x1xf32>
    %33 = vector.shape_cast %30 : vector<8x1xf32> to vector<1x8x1xf32>
    tpu.vector_store %arg4[%c1_19, %c0_20, %c0_21], %33 {strides = array<i32>} : memref<2x8x9xf32, #tpu.memory_space<vmem>>, vector<1x8x1xf32>,
    %34 = vector.extract_strided_slice %27 {offsets = [0, 1], sizes = [8, 7], strides = [1, 1]} : vector<8x8xf32> to vector<8x7xf32>
    %35 = vector.extract_strided_slice %28 {offsets = [0, 0], sizes = [8, 7], strides = [1, 1]} : vector<8x8xf32> to vector<8x7xf32>
    %36 = arith.addf %34, %35 : vector<8x7xf32>
    %c1_22 = arith.constant 1 : index
    %c0_23 = arith.constant 0 : index
    %c1_24 = arith.constant 1 : index
    %37 = vector.load %arg4[%c1_22, %c0_23, %c1_24] : memref<2x8x9xf32, #tpu.memory_space<vmem>>, vector<1x8x7xf32>
    %38 = vector.shape_cast %37 : vector<1x8x7xf32> to vector<8x7xf32>
    %39 = vector.shape_cast %36 : vector<8x7xf32> to vector<1x8x7xf32>
    tpu.vector_store %arg4[%c1_22, %c0_23, %c1_24], %39 {strides = array<i32>} : memref<2x8x9xf32, #tpu.memory_space<vmem>>, vector<1x8x7xf32>,
    %40 = vector.extract_strided_slice %28 {offsets = [0, 7], sizes = [8, 1], strides = [1, 1]} : vector<8x8xf32> to vector<8x1xf32>
    %41 = arith.mulf %40, %2 : vector<8x1xf32>
    %c1_25 = arith.constant 1 : index
    %c0_26 = arith.constant 0 : index
    %c8_27 = arith.constant 8 : index
    %42 = vector.load %arg4[%c1_25, %c0_26, %c8_27] : memref<2x8x9xf32, #tpu.memory_space<vmem>>, vector<1x8x1xf32>
    %43 = vector.shape_cast %42 : vector<1x8x1xf32> to vector<8x1xf32>
    %44 = vector.shape_cast %41 : vector<8x1xf32> to vector<1x8x1xf32>
    tpu.vector_store %arg4[%c1_25, %c0_26, %c8_27], %44 {strides = array<i32>} : memref<2x8x9xf32, #tpu.memory_space<vmem>>, vector<1x8x1xf32>,
    return
  }
  func.func @transform_0(%arg0: i32) -> (i32, i32, i32) {
    %c0_i32 = arith.constant 0 : i32
    %c0_i32_0 = arith.constant 0 : i32
    %c0_i32_1 = arith.constant 0 : i32
    return %arg0, %c0_i32, %c0_i32_0 : i32, i32, i32
  }
  func.func @transform_1(%arg0: i32) -> (i32, i32) {
    %c0_i32 = arith.constant 0 : i32
    %c0_i32_0 = arith.constant 0 : i32
    %c0_i32_1 = arith.constant 0 : i32
    return %c0_i32, %c0_i32_0 : i32, i32
  }
  func.func @transform_2(%arg0: i32) -> (i32, i32) {
    %c0_i32 = arith.constant 0 : i32
    %c0_i32_0 = arith.constant 0 : i32
    %c0_i32_1 = arith.constant 0 : i32
    return %c0_i32, %c0_i32_0 : i32, i32
  }
  func.func @transform_3(%arg0: i32) -> (i32, i32, i32) {
    %c0_i32 = arith.constant 0 : i32
    %c0_i32_0 = arith.constant 0 : i32
    %c0_i32_1 = arith.constant 0 : i32
    return %arg0, %c0_i32, %c0_i32_0 : i32, i32, i32
  }
}

</mosaic_0001>

<llo_original>
// kernel: conv_istft.1
$region0: #{conv_istft.1}
  #allocation0 [shape = 'u32[]', space=smem, size = 0x4, offset = 0x4, fixed_abs, tag = 'smem constant byte address 0x4 - core index']
  #allocation1 [shape = 'u32[72,128]{1,0:T(1,128)}', space=vmem, size = 0x9000, scoped, tag = 'internal scratch']
  %s0 = inlined_call_operand.vmem [shape: f32[2,18,8], index: 0, kind: input, shape index: {}]
  %s1 = inlined_call_operand.vmem [shape: f32[16,18], index: 1, kind: input, shape index: {}]
  %s2 = inlined_call_operand.vmem [shape: f32[8,2], index: 2, kind: input, shape index: {}]
  %s3 = inlined_call_operand.vmem [shape: f32[2,8,9], index: 3, kind: output, shape index: {}]
  %s4 = sld [smem:[#allocation0]]
  $region22: #{conv_istft.1} parent=0
    _
  %s6 = ssub.s32 1, %s4
  %s7 = scalar_select 0, %s6, %s4
  // Predicated region
  $region2: #{conv_istft.1} parent=0 // pred_check
    _
  $region3: #{conv_istft.1} parent=0 // pred_check_branch
    %9 = sbr.rel (0) target = $region5
  $region4: #{conv_istft.1} parent=0 // pred_region
    _
  $region5: #{conv_istft.1} parent=0 // pred_fallthru
    _
  // Predicated region
  $region6: #{conv_istft.1} parent=0 // pred_check
    _
  $region7: #{conv_istft.1} parent=0 // pred_check_branch
    %11 = sbr.rel (0) target = $region9
  $region8: #{conv_istft.1} parent=0 // pred_region
    _
  $region9: #{conv_istft.1} parent=0 // pred_fallthru
    _
  // Predicated region
  $region10: #{conv_istft.1} parent=0 // pred_check
    _
  $region11: #{conv_istft.1} parent=0 // pred_check_branch
    %13 = sbr.rel (0) target = $region13
  $region12: #{conv_istft.1} parent=0 // pred_region
    _
  $region13: #{conv_istft.1} parent=0 // pred_fallthru
    _
  %v14 = vld [vmem:[%s1] sm:$0xff]
  %v15 = vld [vmem:[%s1 + $0x8] sm:$0xff]
  %v16 = vld [vmem:[%s2] sm:$0xff]
  %v17 = vld [vmem:[%s0] sm:$0xff]
  %v18 = vld [vmem:[%s0 + $0x8] sm:$0xff]
  %v19 = vld [vmem:[%s0 + $0x10] sm:$0x3]
  %vm20 = vcmask 146432
  %v22 = vsel %vm20, %v14, 0
  %v25 = vsel %vm20, %v15, 0
  %vm27 = vcmask 1041408
  %v29 = vsel %vm27, %v19, 0
  %31 = vmatpush.msra.mxu0 0.0
  %32 = vmatpush.msra.mxu0 0.0
  %33 = vmatpush.msra.mxu0 0.0
  %34 = vmatpush.msra.mxu0 0.0
  %35 = vmatpush.msra.mxu0 0.0
  %36 = vmatpush.msra.mxu0 0.0
  %37 = vmatpush.msra.mxu0 0.0
  %38 = vmatpush.msra.mxu0 0.0
  %39 = vmatpush.msra.mxu0 0.0
  %40 = vmatpush.msra.mxu0 0.0
  %41 = vmatpush.msra.mxu0 0.0
  %42 = vmatpush.msra.mxu0 0.0
  %43 = vmatpush.msra.mxu0 0.0
  %44 = vmatpush.msra.mxu0 %v29
  %45 = vmatpush.msra.mxu0 %v18
  %46 = vmatpush.msra.mxu0 %v17
  %47 = vmatmul.f32.gmra.mxu0 %v22
  %v48 = vpop.f32.mrf.mxu0
  %v49 = vadd.f32 0.0, %v48
  %50 = vmatmul.f32.gmra.mxu0 %v25
  %v51 = vpop.f32.mrf.mxu0
  %v52 = vadd.f32 0.0, %v51
  %53 = vdwg.mxu0
  %v54 = vmul.f32 %v49, %v16
  %vm55 = vcmask 7168
  %56 = vst.msk [vmem:[%s3] sm:$0xff] %vm55, %v54
  %58 = vrot.lane.b32.xlu0 %v52, 1
  %v59 = vpop.permute.xlu0 %58
  %v61 = vadd.f32 %v49, %v59
  %vm62 = vcmask 64520
  %63 = vst.msk [vmem:[%s3] sm:$0xff] %vm62, %v61
  %65 = vrot.lane.b32.xlu0 %v16, 6
  %v66 = vpop.permute.xlu0 %65
  %v68 = vmul.f32 %v52, %v66
  %70 = vrot.lane.b32.xlu0 %v68, 1
  %v71 = vpop.permute.xlu0 %70
  %vm73 = vcmask 72768
  %74 = vst.msk [vmem:[%s3] sm:$0xff] %vm73, %v71
  %s75 = scalar_lea.vmem %s0, 24
  %v76 = vld [vmem:[%s75] sm:$0xff]
  %v77 = vld [vmem:[%s75 + $0x8] sm:$0xff]
  %v78 = vld [vmem:[%s75 + $0x10] sm:$0x3]
  %v80 = vsel %vm27, %v78, 0
  %82 = vmatpush.msra.mxu0 0.0
  %83 = vmatpush.msra.mxu0 0.0
  %84 = vmatpush.msra.mxu0 0.0
  %85 = vmatpush.msra.mxu0 0.0
  %86 = vmatpush.msra.mxu0 0.0
  %87 = vmatpush.msra.mxu0 0.0
  %88 = vmatpush.msra.mxu0 0.0
  %89 = vmatpush.msra.mxu0 0.0
  %90 = vmatpush.msra.mxu0 0.0
  %91 = vmatpush.msra.mxu0 0.0
  %92 = vmatpush.msra.mxu0 0.0
  %93 = vmatpush.msra.mxu0 0.0
  %94 = vmatpush.msra.mxu0 0.0
  %95 = vmatpush.msra.mxu0 %v80
  %96 = vmatpush.msra.mxu0 %v77
  %97 = vmatpush.msra.mxu0 %v76
  %98 = vmatmul.f32.gmra.mxu0 %v22
  %v99 = vpop.f32.mrf.mxu0
  %v100 = vadd.f32 0.0, %v99
  %101 = vmatmul.f32.gmra.mxu0 %v25
  %v102 = vpop.f32.mrf.mxu0
  %v103 = vadd.f32 0.0, %v102
  %104 = vdwg.mxu0
  %v105 = vmul.f32 %v100, %v16
  %s106 = scalar_lea.vmem %s3, 8
  %107 = vst.msk [vmem:[%s106] sm:$0xff] %vm55, %v105
  %109 = vrot.lane.b32.xlu0 %v103, 1
  %v110 = vpop.permute.xlu0 %109
  %v112 = vadd.f32 %v100, %v110
  %113 = vst.msk [vmem:[%s106] sm:$0xff] %vm62, %v112
  %v114 = vmul.f32 %v103, %v66
  %116 = vrot.lane.b32.xlu0 %v114, 1
  %v117 = vpop.permute.xlu0 %116
  %119 = vst.msk [vmem:[%s106] sm:$0xff] %vm73, %v117
  // Predicated region
  $region14: #{conv_istft.1} parent=0 // pred_check
    _
  $region15: #{conv_istft.1} parent=0 // pred_check_branch
    %121 = sbr.rel (0) target = $region17
  $region16: #{conv_istft.1} parent=0 // pred_region
    _
  $region17: #{conv_istft.1} parent=0 // pred_fallthru
    _
  // Predicated region
  $region18: #{conv_istft.1} parent=0 // pred_check
    _
  $region19: #{conv_istft.1} parent=0 // pred_check_branch
    %123 = sbr.rel (0) target = $region21
  $region20: #{conv_istft.1} parent=0 // pred_region
    _
  $region21: #{conv_istft.1} parent=0 // pred_fallthru
    _

</llo_original>
